<compile_context>
chip_gen: v6e
topology: v6e:2x2x1
jax: 0.10.0
libtpu: 0.0.40
codegen_flags: <defaults>
</compile_context>

<pallas_src>
import math

import numpy as np
import jax
import jax.numpy as jnp
from jax.experimental import pallas as pl
from jax.experimental.pallas import tpu as pltpu


# ---- Pallas kernel ----------------------------------------------------------
def _make_mlp_kernel(fin_pads, fout_pads, bias_col, num_layers):
    """Fused MLP kernel, refs = (x_tile, param_slab, out_tile)."""

    def kernel(x_ref, p_ref, o_ref):
        h = x_ref[...]                                          # (f0, tb) bf16
        row = 0
        for i in range(num_layers):
            fin_p = fin_pads[i]
            fout_p = fout_pads[i]
            w = p_ref[row:row + fout_p, 0:fin_p].astype(jnp.bfloat16)
            b = p_ref[row:row + fout_p, bias_col:bias_col + 1]  # (fout_p, 1) f32
            z = jnp.dot(w, h, preferred_element_type=jnp.float32) + b
            if i != num_layers - 1:
                z = 0.5 * jnp.tanh(0.5 * z) + 0.5               # == sigmoid(z)
                h = z.astype(jnp.bfloat16)                      # bf16 MXU operand
            else:
                h = z
            row += fout_p
        # drop padded rows of the last layer; lane-dense (f_last, tb) store
        o_ref[...] = h[0:o_ref.shape[0], :].astype(o_ref.dtype)

    return kernel


# ---- wrapper ----------------------------------------------------------------
def integrated_brdf_mlp(x, weights, biases, *, tb=1024):
    """Forward pass of IntegratedBrdfMlpNetwork.

    x:        (B, F0) array
    weights:  list of (F_{i+1}, F_i) arrays (PyTorch nn.Linear layout)
    biases:   list of (F_{i+1},) arrays
    Returns (B,) if the final layer has one output (matching .squeeze(1)),
    otherwise (B, F_last).
    """
    B, f0 = x.shape
    num_layers = len(weights)
    assert len(biases) == num_layers and num_layers >= 1
    f_last = weights[-1].shape[0]

    def _round_up(v, m):
        return ((v + m - 1) // m) * m

    # ---- pack all weights/biases into one f32 slab (host-side glue) ---------
    fin_pads, fout_pads = [], []
    prev_pad = f0
    for i, w in enumerate(weights):
        fout, fin = w.shape
        assert fin == (weights[i - 1].shape[0] if i > 0 else f0)
        fin_pads.append(prev_pad)                 # padded input rows of h
        fout_pads.append(_round_up(max(fout, 1), 8))
        prev_pad = fout_pads[-1]
    bias_col = max(fin_pads)
    n_cols = _round_up(bias_col + 1, 8)
    n_rows = sum(fout_pads)

    slab = np.zeros((n_rows, n_cols), np.float32)
    row = 0
    for i, (w, b) in enumerate(zip(weights, biases)):
        fout, fin = w.shape
        slab[row:row + fout, 0:fin] = np.asarray(w, dtype=np.float32)
        slab[row:row + fout, bias_col] = np.asarray(b, dtype=np.float32)
        row += fout_pads[i]
    slab = jnp.asarray(slab)

    # ---- batch tiling: lane-aligned; prefer >=2 grid steps (v7x megacore) ---
    tb = _round_up(max(128, min(int(tb), 8192)), 128)
    b128 = _round_up(B, 128)
    if tb >= b128 and b128 >= 256:
        tb = _round_up(b128 // 2, 128)            # keep >= 2 parallel steps
    tb = min(tb, b128)
    Bp = _round_up(B, tb)

    # batch on lanes: (f0, Bp) bf16 input, (f_last, Bp) f32 output
    xt = jnp.transpose(x).astype(jnp.bfloat16)
    if Bp != B:
        xt = jnp.pad(xt, ((0, 0), (0, Bp - B)))

    kernel = _make_mlp_kernel(tuple(fin_pads), tuple(fout_pads),
                              bias_col, num_layers)

    out = pl.pallas_call(
        kernel,
        out_shape=jax.ShapeDtypeStruct((f_last, Bp), jnp.float32),
        grid_spec=pl.GridSpec(
            grid=(Bp // tb,),
            in_specs=[
                pl.BlockSpec((f0, tb), lambda b: (0, b)),      # batch tile
                pl.BlockSpec(slab.shape, lambda b: (0, 0)),    # resident params
            ],
            out_specs=pl.BlockSpec((f_last, tb), lambda b: (0, b)),
        ),
        compiler_params=pltpu.CompilerParams(
            dimension_semantics=("parallel",)),
    )(xt, slab)

    out = out[:, :B]
    if f_last == 1:
        return out[0].astype(x.dtype)             # matches net(x).squeeze(1)
    return jnp.transpose(out).astype(x.dtype)


# ---- deterministic parameter init (matches nn.Linear default init scheme) ---
def init_params(key, num_features):
    weights, biases = [], []
    for i in range(len(num_features) - 1):
        fan_in, fan_out = num_features[i], num_features[i + 1]
        key, kw, kb = jax.random.split(key, 3)
        bound = 1.0 / math.sqrt(fan_in)
        weights.append(
            jax.random.uniform(kw, (fan_out, fan_in), jnp.float32, -bound, bound))
        biases.append(
            jax.random.uniform(kb, (fan_out,), jnp.float32, -bound, bound))
    return weights, biases


# ---- plain-JAX references (mirror the PyTorch forward) -----------------------
def mlp_ref(x, weights, biases):
    h = x
    n = len(weights)
    for i, (w, b) in enumerate(zip(weights, biases)):
        h = jnp.dot(h, w.T, precision=jax.lax.Precision.HIGHEST) + b
        if i != n - 1:
            h = jax.nn.sigmoid(h)
    if h.shape[1] == 1:
        h = h[:, 0]
    return h


def mlp_ref_bf16(x, weights, biases):
    """Reference that mimics the kernel's bf16 MXU operands (f32 accumulate)."""
    h = x.astype(jnp.bfloat16)
    n = len(weights)
    for i, (w, b) in enumerate(zip(weights, biases)):
        z = jnp.dot(h.astype(jnp.float32),
                    w.T.astype(jnp.bfloat16).astype(jnp.float32),
                    precision=jax.lax.Precision.HIGHEST) + b
        if i != n - 1:
            z = jax.nn.sigmoid(z)
            h = z.astype(jnp.bfloat16)
        else:
            h = z
    if h.shape[1] == 1:
        h = h[:, 0]
    return h


if __name__ == "__main__":
    # TODO(synk): the module's Write() method (C-header weight export) is host
    # file I/O with no kernel equivalent and is intentionally not implemented.
    num_features = (2, 32, 16, 1)     # (n.v, roughness) -> hidden -> hidden -> 1
    B = 512

    key = jax.random.PRNGKey(0)
    kx, kp = jax.random.split(key)
    x = jax.random.uniform(kx, (B, num_features[0]), jnp.float32, 0.0, 1.0)
    weights, biases = init_params(kp, num_features)

    out = integrated_brdf_mlp(x, weights, biases, tb=1024)
    out = jax.block_until_ready(out)

    ref = mlp_ref(x, weights, biases)
    ref_bf16 = mlp_ref_bf16(x, weights, biases)
    assert out.shape == ref.shape == (B,), f"bad shape: {out.shape}"
    err_exact = float(jnp.max(jnp.abs(out - ref)))
    err_matched = float(jnp.max(jnp.abs(out - ref_bf16)))
    assert err_matched < 5e-3, f"mismatch vs bf16-matched ref: {err_matched}"
    assert err_exact < 5e-2, f"mismatch vs exact f32 ref: {err_exact}"

    print("KERNEL_OK")
</pallas_src>

<mosaic_0001>
module attributes {stable_mosaic.version = 11 : i64} {
  func.func @kernel(%arg0: i32, %arg1: memref<2x256xbf16, #tpu.memory_space<vmem>>, %arg2: memref<56x40xf32, #tpu.memory_space<vmem>>, %arg3: memref<1x256xf32, #tpu.memory_space<vmem>>) attributes {dimension_semantics = [#tpu.dimension_semantics<parallel>], iteration_bounds = array<i64: 2>, scalar_prefetch = 0 : i64, scratch_operands = 0 : i64, tpu.core_type = #tpu.core_type<tc>, window_params = [{transform_indices = @transform_0, window_bounds = array<i64: 2, 256>}, {pipeline_mode = #tpu.pipeline_mode<synchronous>, transform_indices = @transform_1, window_bounds = array<i64: 56, 40>}, {transform_indices = @transform_2, window_bounds = array<i64: 1, 256>}]} {
    %c0 = arith.constant 0 : index
    %c0_0 = arith.constant 0 : index
    %0 = vector.load %arg1[%c0, %c0_0] : memref<2x256xbf16, #tpu.memory_space<vmem>>, vector<2x256xbf16>
    %c0_1 = arith.constant 0 : index
    %c0_2 = arith.constant 0 : index
    %1 = vector.load %arg2[%c0_1, %c0_2] : memref<56x40xf32, #tpu.memory_space<vmem>>, vector<32x2xf32>
    %2 = arith.truncf %1 : vector<32x2xf32> to vector<32x2xbf16>
    %c0_3 = arith.constant 0 : index
    %c32 = arith.constant 32 : index
    %3 = vector.load %arg2[%c0_3, %c32] : memref<56x40xf32, #tpu.memory_space<vmem>>, vector<32x1xf32>
    %cst = arith.constant dense<0.000000e+00> : vector<32x256xf32>
    %4 = tpu.matmul %2, %0, %cst {dimension_numbers = #tpu.dot_dimension_numbers<[1], [0], [0], [1], [0, 0, 1, 1], [], []>} : vector<32x2xbf16>, vector<2x256xbf16>, vector<32x256xf32> -> vector<32x256xf32>
    %5 = vector.broadcast %3 : vector<32x1xf32> to vector<32x256xf32>
    %6 = arith.addf %4, %5 : vector<32x256xf32>
    %cst_4 = arith.constant 5.000000e-01 : f32
    %7 = vector.broadcast %cst_4 : f32 to vector<32x256xf32>
    %8 = arith.mulf %7, %6 : vector<32x256xf32>
    %9 = math.tanh %8 : vector<32x256xf32>
    %cst_5 = arith.constant 5.000000e-01 : f32
    %10 = vector.broadcast %cst_5 : f32 to vector<32x256xf32>
    %11 = arith.mulf %10, %9 : vector<32x256xf32>
    %cst_6 = arith.constant 5.000000e-01 : f32
    %12 = vector.broadcast %cst_6 : f32 to vector<32x256xf32>
    %13 = arith.addf %11, %12 : vector<32x256xf32>
    %14 = arith.truncf %13 : vector<32x256xf32> to vector<32x256xbf16>
    %c32_7 = arith.constant 32 : index
    %c0_8 = arith.constant 0 : index
    %15 = vector.load %arg2[%c32_7, %c0_8] : memref<56x40xf32, #tpu.memory_space<vmem>>, vector<16x32xf32>
    %16 = arith.truncf %15 : vector<16x32xf32> to vector<16x32xbf16>
    %c32_9 = arith.constant 32 : index
    %c32_10 = arith.constant 32 : index
    %17 = vector.load %arg2[%c32_9, %c32_10] : memref<56x40xf32, #tpu.memory_space<vmem>>, vector<16x1xf32>
    %cst_11 = arith.constant dense<0.000000e+00> : vector<16x256xf32>
    %18 = tpu.matmul %16, %14, %cst_11 {dimension_numbers = #tpu.dot_dimension_numbers<[1], [0], [0], [1], [0, 0, 1, 1], [], []>} : vector<16x32xbf16>, vector<32x256xbf16>, vector<16x256xf32> -> vector<16x256xf32>
    %19 = vector.broadcast %17 : vector<16x1xf32> to vector<16x256xf32>
    %20 = arith.addf %18, %19 : vector<16x256xf32>
    %cst_12 = arith.constant 5.000000e-01 : f32
    %21 = vector.broadcast %cst_12 : f32 to vector<16x256xf32>
    %22 = arith.mulf %21, %20 : vector<16x256xf32>
    %23 = math.tanh %22 : vector<16x256xf32>
    %cst_13 = arith.constant 5.000000e-01 : f32
    %24 = vector.broadcast %cst_13 : f32 to vector<16x256xf32>
    %25 = arith.mulf %24, %23 : vector<16x256xf32>
    %cst_14 = arith.constant 5.000000e-01 : f32
    %26 = vector.broadcast %cst_14 : f32 to vector<16x256xf32>
    %27 = arith.addf %25, %26 : vector<16x256xf32>
    %28 = arith.truncf %27 : vector<16x256xf32> to vector<16x256xbf16>
    %c48 = arith.constant 48 : index
    %c0_15 = arith.constant 0 : index
    %29 = vector.load %arg2[%c48, %c0_15] : memref<56x40xf32, #tpu.memory_space<vmem>>, vector<8x16xf32>
    %30 = arith.truncf %29 : vector<8x16xf32> to vector<8x16xbf16>
    %c48_16 = arith.constant 48 : index
    %c32_17 = arith.constant 32 : index
    %31 = vector.load %arg2[%c48_16, %c32_17] : memref<56x40xf32, #tpu.memory_space<vmem>>, vector<8x1xf32>
    %cst_18 = arith.constant dense<0.000000e+00> : vector<8x256xf32>
    %32 = tpu.matmul %30, %28, %cst_18 {dimension_numbers = #tpu.dot_dimension_numbers<[1], [0], [0], [1], [0, 0, 1, 1], [], []>} : vector<8x16xbf16>, vector<16x256xbf16>, vector<8x256xf32> -> vector<8x256xf32>
    %33 = vector.broadcast %31 : vector<8x1xf32> to vector<8x256xf32>
    %34 = arith.addf %32, %33 : vector<8x256xf32>
    %35 = vector.extract_strided_slice %34 {offsets = [0, 0], sizes = [1, 256], strides = [1, 1]} : vector<8x256xf32> to vector<1x256xf32>
    %c0_19 = arith.constant 0 : index
    %c0_20 = arith.constant 0 : index
    %36 = vector.load %arg3[%c0_19, %c0_20] : memref<1x256xf32, #tpu.memory_space<vmem>>, vector<1x256xf32>
    tpu.vector_store %arg3[%c0_19, %c0_20], %35 {strides = array<i32>} : memref<1x256xf32, #tpu.memory_space<vmem>>, vector<1x256xf32>,
    return
  }
  func.func @transform_0(%arg0: i32) -> (i32, i32) {
    %c0_i32 = arith.constant 0 : i32
    %c0_i32_0 = arith.constant 0 : i32
    return %c0_i32, %arg0 : i32, i32
  }
  func.func @transform_1(%arg0: i32) -> (i32, i32) {
    %c0_i32 = arith.constant 0 : i32
    %c0_i32_0 = arith.constant 0 : i32
    %c0_i32_1 = arith.constant 0 : i32
    return %c0_i32, %c0_i32_0 : i32, i32
  }
  func.func @transform_2(%arg0: i32) -> (i32, i32) {
    %c0_i32 = arith.constant 0 : i32
    %c0_i32_0 = arith.constant 0 : i32
    return %c0_i32, %arg0 : i32, i32
  }
}

</mosaic_0001>

<llo_original>
// kernel: tpu_custom_call.1
$region0: #{tpu_custom_call.1}
  #allocation0 [shape = 'u32[]', space=smem, size = 0x4, offset = 0x4, fixed_abs, tag = 'smem constant byte address 0x4 - core index']
  #allocation1 [shape = 'u32[144,128]{1,0:T(1,128)}', space=vmem, size = 0x12000, scoped, tag = 'internal scratch']
  %s0 = inlined_call_operand.vmem [shape: bf16[2,512], index: 0, kind: input, shape index: {}]
  %s1 = inlined_call_operand.vmem [shape: f32[56,40], index: 1, kind: input, shape index: {}]
  %s2 = inlined_call_operand.hbm [shape: f32[1,512], index: 2, kind: output, shape index: {}]
  %s3 = sld [smem:[#allocation0]]
  $region41: #{tpu_custom_call.1} parent=0
    _
  %s5 = ssub.s32 1, %s3
  %s6 = scalar_select 0, %s5, %s3
  $region1: #{tpu_custom_call.1} parent=0
    #allocation2 [shape = 'u8[2048]{0}', space=vmem, size = 0x800, scoped, tag = 'output window, operand 0']
    #allocation3 [shape = 's32[2]{0}', space=sflag, size = 0x8, scoped, tag = 'scoped memory for tpu_custom_call.1']
    %7 = vsyncpa [#allocation3], 0
    %s8 = scalar_lea.sflag [#allocation3], 1
    %9 = vsyncpa %s8, 0
    loop: start=0, step=1, limit=4
    $region2: #{tpu_custom_call.1} parent=1 // loop_pre_header
      _
    $region3: #{tpu_custom_call.1} parent=1 // loop_header
      %s11 = sphi 0, %s15
      %p12 = scmp.ge.s32.totalorder %s11, 4
      %s21 = sphi 0, %s23
      %s24 = sphi 0, %s21
      %s25 = sphi 0, %s24
      %s41 = sphi 0, %s25
      %s45 = sphi 0, %s45
      %s47 = sphi 0, %s45
      %s48 = sphi 0, %s47
      %s62 = sphi 0, %s48
      %s68 = sphi 0, %s70
      %s71 = sphi 0, %s68
      %s72 = sphi 0, %s71
      %s88 = sphi 0, %s72
    $region4: #{tpu_custom_call.1} parent=1 // loop_header_branch
      %14 = sbr.rel (%p12) target = $region8
    $region5: #{tpu_custom_call.1} parent=1 // loop_body
      %s16 = ssub.s32 %s11, 1
      %s17 = ssub.s32 %s11, 2
      %s18 = sadd.s32 %s11, 1
      %s19 = ssub.s32 %s11, %s18
      %p20 = scmp.eq.s32.totalorder %s19, 0
      %s22 = sadd.s32 %s21, 1
      %s23 = scalar_select %p20, %s21, %s22
      %p26 = pneg %p20
      %p27 = scmp.eq.s32.totalorder %s11, 1
      %p28 = por %p26, %p27
      %p29 = scmp.ne.s32.totalorder %s21, %s24
      %p30 = scmp.eq.s32.totalorder %s11, 0
      %p31 = por %p29, %p30
      %p32 = scmp.ne.s32.totalorder %s21, %s24
      %p33 = scmp.eq.s32.totalorder %s16, 1
      %p34 = por %p32, %p33
      %p35 = scmp.ne.s32.totalorder %s24, %s25
      %p36 = scmp.eq.s32.totalorder %s16, 0
      %p37 = por %p35, %p36
      %p38 = scmp.ne.s32.totalorder %s24, %s25
      %p39 = scmp.eq.s32.totalorder %s17, 1
      %p40 = por %p38, %p39
      %p42 = scmp.ne.s32.totalorder %s25, %s41
      %p43 = scmp.eq.s32.totalorder %s17, 0
      %p44 = por %p42, %p43
      %s46 = sadd.s32 %s45, 1
      %p49 = scmp.eq.s32.totalorder %s11, 1
      %p50 = scmp.ne.s32.totalorder %s45, %s47
      %p51 = scmp.eq.s32.totalorder %s11, 0
      %p52 = por %p50, %p51
      %p53 = scmp.ne.s32.totalorder %s45, %s47
      %p54 = scmp.eq.s32.totalorder %s16, 1
      %p55 = por %p53, %p54
      %p56 = scmp.ne.s32.totalorder %s47, %s48
      %p57 = scmp.eq.s32.totalorder %s16, 0
      %p58 = por %p56, %p57
      %p59 = scmp.ne.s32.totalorder %s47, %s48
      %p60 = scmp.eq.s32.totalorder %s17, 1
      %p61 = por %p59, %p60
      %p63 = scmp.ne.s32.totalorder %s48, %s62
      %p64 = scmp.eq.s32.totalorder %s17, 0
      %p65 = por %p63, %p64
      %s66 = ssub.s32 %s11, %s18
      %p67 = scmp.eq.s32.totalorder %s66, 0
      %s69 = sadd.s32 %s68, 1
      %s70 = scalar_select %p67, %s68, %s69
      %p73 = pneg %p67
      %p74 = scmp.eq.s32.totalorder %s11, 1
      %p75 = por %p73, %p74
      %p76 = scmp.ne.s32.totalorder %s68, %s71
      %p77 = scmp.eq.s32.totalorder %s11, 0
      %p78 = por %p76, %p77
      %p79 = scmp.ne.s32.totalorder %s68, %s71
      %p80 = scmp.eq.s32.totalorder %s16, 1
      %p81 = por %p79, %p80
      %p82 = scmp.ne.s32.totalorder %s71, %s72
      %p83 = scmp.eq.s32.totalorder %s16, 0
      %p84 = por %p82, %p83
      %p85 = scmp.ne.s32.totalorder %s71, %s72
      %p86 = scmp.eq.s32.totalorder %s17, 1
      %p87 = por %p85, %p86
      %p89 = scmp.ne.s32.totalorder %s72, %s88
      %p90 = scmp.eq.s32.totalorder %s17, 0
      %p91 = por %p89, %p90
      %p92 = scmp.le.s32.totalorder 1, %s11
      %p93 = scmp.lt.s32.totalorder %s11, 3
      %p94 = pnand %p92, %p93
      %p95 = pneg %p94
      // Predicated region
      $region9: #{tpu_custom_call.1} parent=5 // pred_check
        _
      $region10: #{tpu_custom_call.1} parent=5 // pred_check_branch
        %97 = sbr.rel (%p94) target = $region12
      $region11: #{tpu_custom_call.1} parent=5 // pred_region
        %s98 = ssub.s32 %s11, 1
        // Predicated region
        $region13: #{tpu_custom_call.1} parent=11 // pred_check
          %p99 = pneg %p58
        $region14: #{tpu_custom_call.1} parent=11 // pred_check_branch
          %101 = sbr.rel (%p99) target = $region16
        $region15: #{tpu_custom_call.1} parent=11 // pred_region
          _
        $region16: #{tpu_custom_call.1} parent=11 // pred_fallthru
          _
      $region12: #{tpu_custom_call.1} parent=5 // pred_fallthru
        _
      %p102 = scmp.lt.s32.totalorder %s11, 2
      // Predicated region
      $region17: #{tpu_custom_call.1} parent=5 // pred_check
        %p103 = pneg %p102
      $region18: #{tpu_custom_call.1} parent=5 // pred_check_branch
        %105 = sbr.rel (%p103) target = $region20
      $region19: #{tpu_custom_call.1} parent=5 // pred_region
        // Predicated region
        $region21: #{tpu_custom_call.1} parent=19 // pred_check
          %p106 = pneg %p31
        $region22: #{tpu_custom_call.1} parent=19 // pred_check_branch
          %108 = sbr.rel (%p106) target = $region24
        $region23: #{tpu_custom_call.1} parent=19 // pred_region
          %s109 = smul.u32 2, %s11
          %p110 = scmp.lt.s32.totalorder %s109, 3
          %s111 = scalar_select %p110, %s109, 3
          %s112 = scalar_lea.vmem %s0, %s111
          %s113 = smul.u32 2, %s11
        $region24: #{tpu_custom_call.1} parent=19 // pred_fallthru
          _
      $region20: #{tpu_custom_call.1} parent=5 // pred_fallthru
        _
      %p114 = scmp.le.s32.totalorder 1, %s11
      %p115 = scmp.lt.s32.totalorder %s11, 3
      %p116 = pnand %p114, %p115
      %p117 = pneg %p116
      // Predicated region
      $region25: #{tpu_custom_call.1} parent=5 // pred_check
        _
      $region26: #{tpu_custom_call.1} parent=5 // pred_check_branch
        %119 = sbr.rel (%p116) target = $region28
      $region27: #{tpu_custom_call.1} parent=5 // pred_region
        %s120 = ssub.s32 %s11, 1
        %s121 = smul.u32 2, %s16
        %p122 = scmp.lt.s32.totalorder %s121, 3
        %s123 = scalar_select %p122, %s121, 3
        %s124 = scalar_lea.vmem %s0, %s123
        %p125 = pneg %p37
        %p126 = pneg %p34
        %p127 = pneg %p58
        %p128 = pneg %p55
        %p129 = pneg %p84
        %p130 = pneg %p81
        %s131 = sand.u32 %s71, 1
        %s132 = scalar_lea.sflag [#allocation3], %s131
        %s133 = sand.u32 %s71, 1
        %s134 = smul.addr %s133, 2
        %s135 = scalar_lea.vmem [#allocation2], %s134
        %s136 = smul.u32 2, %s16
        %p137 = scmp.lt.s32.totalorder %s136, 3
        %s138 = scalar_select %p137, %s136, 3
        %s139 = scalar_lea.vmem %s0, %s138
        %s140 = smul.u32 2, %s16
        %s141 = smul.u32 2, %s16
        %v143 = vld [vmem:[%s139] sm:$0x3]
        %v144 = vld [vmem:[%s1] sm:$0xff]
        %v145 = vld [vmem:[%s1 + $0x8] sm:$0xff]
        %v146 = vld [vmem:[%s1 + $0x10] sm:$0xff]
        %v147 = vld [vmem:[%s1 + $0x18] sm:$0xff]
        %v148 = vpack.c.bf16 %v145, %v144
        %v149 = vpack.c.bf16 %v147, %v146
        %151 = vset.pattern.permute.xlu0 32
        %152 = vperm.xlu0 %151, %v144
        %v153 = vpop.permute.xlu0 %152
        %156 = vset.pattern.permute.xlu0 32
        %157 = vperm.xlu0 %156, %v145
        %v158 = vpop.permute.xlu0 %157
        %161 = vset.pattern.permute.xlu0 32
        %162 = vperm.xlu0 %161, %v146
        %v163 = vpop.permute.xlu0 %162
        %166 = vset.pattern.permute.xlu0 32
        %167 = vperm.xlu0 %166, %v147
        %v168 = vpop.permute.xlu0 %167
        %v172 = vunpack.c.l.s4 1966171168
        %v173 = vunpack.c.0.s8 %v172
        %v174 = vlaneseq
        %v175 = vshrl.u32 %v174, 7
        %v176 = vsub.s32 %v173, %v175
        %v177 = vrot.slane %v143, %v176
        %v178 = vcombine.high %v177, %v177
        %v180 = vunpack.c.l.s4 1966171168
        %v181 = vunpack.c.0.s8 %v180
        %v182 = vlaneseq
        %v183 = vshrl.u32 %v182, 7
        %v184 = vsub.s32 %v181, %v183
        %v185 = vrot.slane %v177, %v184
        %v187 = vunpack.c.l.s4 1966171168
        %v188 = vunpack.c.0.s8 %v187
        %v189 = vlaneseq
        %v190 = vshrl.u32 %v189, 7
        %v191 = vsub.s32 %v188, %v190
        %v192 = vrot.slane %v178, %v191
        %vm193 = vcmask 15360
        %v195 = vsel %vm193, %v148, 0
        %v198 = vsel %vm193, %v149, 0
        %vm200 = vcmask 1040384
        %v202 = vsel %vm200, %v185, 0
        %v205 = vsel %vm200, %v192, 0
        %207 = vmatprep.subr.bf16.mxu0 0
        %208 = vmatpush1.bf16.msra.mxu0 0
        %209 = vmatprep.subr.bf16.mxu0 0
        %210 = vmatpush1.bf16.msra.mxu0 0
        %211 = vmatprep.subr.bf16.mxu0 0
        %212 = vmatpush1.bf16.msra.mxu0 0
        %213 = vmatprep.subr.bf16.mxu0 0
        %214 = vmatpush1.bf16.msra.mxu0 0
        %215 = vmatprep.subr.bf16.mxu0 0
        %216 = vmatpush1.bf16.msra.mxu0 0
        %217 = vmatprep.subr.bf16.mxu0 0
        %218 = vmatpush1.bf16.msra.mxu0 0
        %219 = vmatprep.subr.bf16.mxu0 0
        %220 = vmatpush1.bf16.msra.mxu0 0
        %221 = vmatprep.subr.bf16.mxu0 %v205
        %222 = vmatpush1.bf16.msra.mxu0 %v202
        %223 = vmatprep.subr.bf16.mxu0 0
        %224 = vmatpush2.bf16.msra.mxu0 0
        %225 = vmatprep.subr.bf16.mxu0 0
        %226 = vmatpush2.bf16.msra.mxu0 0
        %227 = vmatprep.subr.bf16.mxu0 0
        %228 = vmatpush2.bf16.msra.mxu0 0
        %229 = vmatprep.subr.bf16.mxu0 0
        %230 = vmatpush2.bf16.msra.mxu0 0
        %231 = vmatprep.subr.bf16.mxu0 0
        %232 = vmatpush2.bf16.msra.mxu0 0
        %233 = vmatprep.subr.bf16.mxu0 0
        %234 = vmatpush2.bf16.msra.mxu0 0
        %235 = vmatprep.subr.bf16.mxu0 0
        %236 = vmatpush2.bf16.msra.mxu0 0
        %237 = vmatprep.subr.bf16.mxu0 0
        %238 = vmatpush2.bf16.msra.mxu0 0
        %239 = vmatprep.mubr.bf16.mxu0 0
        %240 = vmatmul.mubr.bf16.gmra.mxu0 %v195
        %v241 = vpop.f32.mrf.mxu0
        %v242 = vadd.f32 %v153, %v241
        %v243 = vpop.f32.mrf.mxu0
        %v244 = vadd.f32 %v153, %v243
        %v245 = vpop.f32.mrf.mxu0
        %v246 = vadd.f32 %v158, %v245
        %v247 = vpop.f32.mrf.mxu0
        %v248 = vadd.f32 %v158, %v247
        %249 = vmatprep.mubr.bf16.mxu0 0
        %250 = vmatmul.mubr.bf16.gmra.mxu0 %v198
        %v251 = vpop.f32.mrf.mxu0
        %v252 = vadd.f32 %v163, %v251
        %v253 = vpop.f32.mrf.mxu0
        %v254 = vadd.f32 %v163, %v253
        %v255 = vpop.f32.mrf.mxu0
        %v256 = vadd.f32 %v168, %v255
        %v257 = vpop.f32.mrf.mxu0
        %v258 = vadd.f32 %v168, %v257
        %259 = vdwg.mxu0
        %v260 = vmul.f32 %v242, 0.5
        %v261 = vmul.f32 %v244, 0.5
        %v262 = vmul.f32 %v246, 0.5
        %v263 = vmul.f32 %v248, 0.5
        %v264 = vmul.f32 %v252, 0.5
        %v265 = vmul.f32 %v254, 0.5
        %v266 = vmul.f32 %v256, 0.5
        %v267 = vmul.f32 %v258, 0.5
        %v268 = vtanh.pop %v260
        %v269 = vtanh.pop %v261
        %v270 = vtanh.pop %v262
        %v271 = vtanh.pop %v263
        %v272 = vtanh.pop %v264
        %v273 = vtanh.pop %v265
        %v274 = vtanh.pop %v266
        %v275 = vtanh.pop %v267
        %v276 = vmul.f32 %v268, 0.5
        %v277 = vmul.f32 %v269, 0.5
        %v278 = vmul.f32 %v270, 0.5
        %v279 = vmul.f32 %v271, 0.5
        %v280 = vmul.f32 %v272, 0.5
        %v281 = vmul.f32 %v273, 0.5
        %v282 = vmul.f32 %v274, 0.5
        %v283 = vmul.f32 %v275, 0.5
        %v284 = vadd.f32 %v276, 0.5
        %v285 = vadd.f32 %v277, 0.5
        %v286 = vadd.f32 %v278, 0.5
        %v287 = vadd.f32 %v279, 0.5
        %v288 = vadd.f32 %v280, 0.5
        %v289 = vadd.f32 %v281, 0.5
        %v290 = vadd.f32 %v282, 0.5
        %v291 = vadd.f32 %v283, 0.5
        %v292 = vpack.c.bf16 %v286, %v284
        %v293 = vpack.c.bf16 %v287, %v285
        %v294 = vpack.c.bf16 %v290, %v288
        %v295 = vpack.c.bf16 %v291, %v289
        %v296 = vld [vmem:[%s1 + $0x20] sm:$0xff]
        %v297 = vld [vmem:[%s1 + $0x28] sm:$0xff]
        %v298 = vpack.c.bf16 %v297, %v296
        %300 = vset.pattern.permute.xlu0 32
        %301 = vperm.xlu0 %300, %v296
        %v302 = vpop.permute.xlu0 %301
        %305 = vset.pattern.permute.xlu0 32
        %306 = vperm.xlu0 %305, %v297
        %v307 = vpop.permute.xlu0 %306
        %vm309 = vcmask 261120
        %v311 = vsel %vm309, %v298, 0
        %313 = vmatprep.subr.bf16.mxu0 0
        %314 = vmatpush1.bf16.msra.mxu0 0
        %315 = vmatprep.subr.bf16.mxu0 0
        %316 = vmatpush1.bf16.msra.mxu0 0
        %317 = vmatprep.subr.bf16.mxu0 0
        %318 = vmatpush1.bf16.msra.mxu0 0
        %319 = vmatprep.subr.bf16.mxu0 0
        %320 = vmatpush1.bf16.msra.mxu0 0
        %321 = vmatprep.subr.bf16.mxu0 0
        %322 = vmatpush1.bf16.msra.mxu0 0
        %323 = vmatprep.subr.bf16.mxu0 0
        %324 = vmatpush1.bf16.msra.mxu0 0
        %325 = vmatprep.subr.bf16.mxu0 %v295
        %326 = vmatpush1.bf16.msra.mxu0 %v294
        %327 = vmatprep.subr.bf16.mxu0 %v293
        %328 = vmatpush1.bf16.msra.mxu0 %v292
        %329 = vmatprep.subr.bf16.mxu0 0
        %330 = vmatpush2.bf16.msra.mxu0 0
        %331 = vmatprep.subr.bf16.mxu0 0
        %332 = vmatpush2.bf16.msra.mxu0 0
        %333 = vmatprep.subr.bf16.mxu0 0
        %334 = vmatpush2.bf16.msra.mxu0 0
        %335 = vmatprep.subr.bf16.mxu0 0
        %336 = vmatpush2.bf16.msra.mxu0 0
        %337 = vmatprep.subr.bf16.mxu0 0
        %338 = vmatpush2.bf16.msra.mxu0 0
        %339 = vmatprep.subr.bf16.mxu0 0
        %340 = vmatpush2.bf16.msra.mxu0 0
        %341 = vmatprep.subr.bf16.mxu0 0
        %342 = vmatpush2.bf16.msra.mxu0 0
        %343 = vmatprep.subr.bf16.mxu0 0
        %344 = vmatpush2.bf16.msra.mxu0 0
        %345 = vmatprep.mubr.bf16.mxu0 0
        %346 = vmatmul.mubr.bf16.gmra.mxu0 %v311
        %v347 = vpop.f32.mrf.mxu0
        %v348 = vadd.f32 %v302, %v347
        %v349 = vpop.f32.mrf.mxu0
        %v350 = vadd.f32 %v302, %v349
        %v351 = vpop.f32.mrf.mxu0
        %v352 = vadd.f32 %v307, %v351
        %v353 = vpop.f32.mrf.mxu0
        %v354 = vadd.f32 %v307, %v353
        %355 = vdwg.mxu0
        %v356 = vmul.f32 %v348, 0.5
        %v357 = vmul.f32 %v350, 0.5
        %v358 = vmul.f32 %v352, 0.5
        %v359 = vmul.f32 %v354, 0.5
        %v360 = vtanh.pop %v356
        %v361 = vtanh.pop %v357
        %v362 = vtanh.pop %v358
        %v363 = vtanh.pop %v359
        %v364 = vmul.f32 %v360, 0.5
        %v365 = vmul.f32 %v361, 0.5
        %v366 = vmul.f32 %v362, 0.5
        %v367 = vmul.f32 %v363, 0.5
        %v368 = vadd.f32 %v364, 0.5
        %v369 = vadd.f32 %v365, 0.5
        %v370 = vadd.f32 %v366, 0.5
        %v371 = vadd.f32 %v367, 0.5
        %v372 = vpack.c.bf16 %v370, %v368
        %v373 = vpack.c.bf16 %v371, %v369
        %v374 = vld [vmem:[%s1 + $0x30] sm:$0xff]
        %v375 = vpack.c.bf16 %v374, %v374
        %377 = vset.pattern.permute.xlu0 32
        %378 = vperm.xlu0 %377, %v374
        %v379 = vpop.permute.xlu0 %378
        %vm381 = vcmask 130048
        %v383 = vsel %vm381, %v375, 0
        %385 = vmatprep.subr.bf16.mxu0 0
        %386 = vmatpush1.bf16.msra.mxu0 0
        %387 = vmatprep.subr.bf16.mxu0 0
        %388 = vmatpush1.bf16.msra.mxu0 0
        %389 = vmatprep.subr.bf16.mxu0 0
        %390 = vmatpush1.bf16.msra.mxu0 0
        %391 = vmatprep.subr.bf16.mxu0 0
        %392 = vmatpush1.bf16.msra.mxu0 0
        %393 = vmatprep.subr.bf16.mxu0 0
        %394 = vmatpush1.bf16.msra.mxu0 0
        %395 = vmatprep.subr.bf16.mxu0 0
        %396 = vmatpush1.bf16.msra.mxu0 0
        %397 = vmatprep.subr.bf16.mxu0 0
        %398 = vmatpush1.bf16.msra.mxu0 0
        %399 = vmatprep.subr.bf16.mxu0 %v373
        %400 = vmatpush1.bf16.msra.mxu0 %v372
        %401 = vmatprep.subr.bf16.mxu0 0
        %402 = vmatpush2.bf16.msra.mxu0 0
        %403 = vmatprep.subr.bf16.mxu0 0
        %404 = vmatpush2.bf16.msra.mxu0 0
        %405 = vmatprep.subr.bf16.mxu0 0
        %406 = vmatpush2.bf16.msra.mxu0 0
        %407 = vmatprep.subr.bf16.mxu0 0
        %408 = vmatpush2.bf16.msra.mxu0 0
        %409 = vmatprep.subr.bf16.mxu0 0
        %410 = vmatpush2.bf16.msra.mxu0 0
        %411 = vmatprep.subr.bf16.mxu0 0
        %412 = vmatpush2.bf16.msra.mxu0 0
        %413 = vmatprep.subr.bf16.mxu0 0
        %414 = vmatpush2.bf16.msra.mxu0 0
        %415 = vmatprep.subr.bf16.mxu0 0
        %416 = vmatpush2.bf16.msra.mxu0 0
        %417 = vmatprep.mubr.bf16.mxu0 0
        %418 = vmatmul.mubr.bf16.gmra.mxu0 %v383
        %v419 = vpop.f32.mrf.mxu0
        %v420 = vadd.f32 %v379, %v419
        %v421 = vpop.f32.mrf.mxu0
        %v422 = vadd.f32 %v379, %v421
        %v423 = vpop.f32.mrf.mxu0
        %v424 = vpop.f32.mrf.mxu0
        %425 = vdwg.mxu0
        %v428 = vcombine.low %v420, %v422
        %v430 = vunpack.c.l.s4 1966171168
        %v431 = vunpack.c.0.s8 %v430
        %v432 = vlaneseq
        %v433 = vshrl.u32 %v432, 7
        %v434 = vsub.s32 %v431, %v433
        %v435 = vrot.slane %v428, %v434
        %v437 = vunpack.c.l.s4 1966171168
        %v438 = vunpack.c.0.s8 %v437
        %v439 = vlaneseq
        %v440 = vshrl.u32 %v439, 7
        %v441 = vsub.s32 %v438, %v440
        %v442 = vrot.slane %v435, %v441
        %v444 = vlaneseq
        %vm445 = vcmp.ge.s32.totalorder %v444, 0
        %vm446 = vcmp.lt.s32.totalorder %v444, 256
        %vm447 = vmand %vm445, %vm446
        %448 = vst.msk [vmem:[%s135] sm:$0x3] %vm447, %v442
        %s449 = sand.u32 %s71, 1
        %s450 = scalar_lea.sflag [#allocation3], %s449
        %s451 = sand.u32 %s71, 1
        %s452 = smul.addr %s451, 2
        %s453 = scalar_lea.vmem [#allocation2], %s452
        // Predicated region
        $region29: #{tpu_custom_call.1} parent=27 // pred_check
          %p454 = pneg %p81
        $region30: #{tpu_custom_call.1} parent=27 // pred_check_branch
          %456 = sbr.rel (%p454) target = $region32
        $region31: #{tpu_custom_call.1} parent=27 // pred_region
          %s457 = smul.u32 2, %s16
          %s459 = ssub.s32 32, 32
          %460 = vsyncadd %s450, %s459
          %s461 = smul.addr %s457, 16
          %s462 = scalar_lea.hbm %s2, %s461
          %s464 = sshll.u32 %s453, 4
          %s465 = int_to_ptr.vmem [resolvable:$true] %s464
          %467 = dma.vmem_to_hbm [thread:$0]  %s465, 32, %s462, %s450
        $region32: #{tpu_custom_call.1} parent=27 // pred_fallthru
          _
      $region28: #{tpu_custom_call.1} parent=5 // pred_fallthru
        _
      %p468 = scmp.le.s32.totalorder 2, %s11
      // Predicated region
      $region33: #{tpu_custom_call.1} parent=5 // pred_check
        %p469 = pneg %p468
      $region34: #{tpu_custom_call.1} parent=5 // pred_check_branch
        %471 = sbr.rel (%p469) target = $region36
      $region35: #{tpu_custom_call.1} parent=5 // pred_region
        %s472 = ssub.s32 %s11, 2
        // Predicated region
        $region37: #{tpu_custom_call.1} parent=35 // pred_check
          %p473 = pneg %p87
        $region38: #{tpu_custom_call.1} parent=35 // pred_check_branch
          %475 = sbr.rel (%p473) target = $region40
        $region39: #{tpu_custom_call.1} parent=35 // pred_region
          %s476 = sand.u32 %s72, 1
          %s477 = scalar_lea.sflag [#allocation3], %s476
          %s478 = sand.u32 %s72, 1
          %s479 = smul.addr %s478, 2
          %s480 = scalar_lea.vmem [#allocation2], %s479
          %481 = dma.done %s477, 32
        $region40: #{tpu_custom_call.1} parent=35 // pred_fallthru
          _
      $region36: #{tpu_custom_call.1} parent=5 // pred_fallthru
        _
    $region6: #{tpu_custom_call.1} parent=1 // loop_footer
      %s15 = sadd.s32 1, %s11
    $region7: #{tpu_custom_call.1} parent=1 // loop_footer_branch
      %10 = sbr.rel target = $region3
    $region8: #{tpu_custom_call.1} parent=1 // loop_exit
      _
    %482 = vsyncpa [#allocation3], 1
    %s483 = scalar_lea.sflag [#allocation3], 1
    %484 = vsyncpa %s483, 1

</llo_original>
